<compile_context>
chip_gen: v7x
topology: tpu7x:2x2x1
jax: 0.10.0
libtpu: 0.0.40
codegen_flags: <defaults>
</compile_context>

<pallas_src>
import functools
import math

import jax
import jax.numpy as jnp
from jax import lax
from jax.experimental import pallas as pl
from jax.experimental.pallas import tpu as pltpu


def _round_up(x, m):
    return ((x + m - 1) // m) * m


def _cdiv(a, b):
    return (a + b - 1) // b


def _pick_tile(size, max_tile, align):
    size_a = max(_round_up(size, align), align)
    n = _cdiv(size_a, max_tile)
    t = _round_up(_cdiv(size_a, n), align)
    return t, n * t


# 48 MiB scoped VMEM: above the v5e/v6e/v7x defaults, below every chip's
# physical capacity (v7x has 64 MiB physical).  Working sets below are kept
# well under 16 MiB anyway so v5e's default would also work.
_VMEM_LIMIT = 48 * 1024 * 1024
_BAND_BYTES = 4 * 1024 * 1024      # bf16 input band budget for the direct conv


def _cparams(dims):
    return pltpu.CompilerParams(dimension_semantics=dims,
                                vmem_limit_bytes=_VMEM_LIMIT)


# ----------------------------------------------------------------------------
# Fused matmul kernel (1x1 convs, im2col convs, deconv)
# ----------------------------------------------------------------------------

def _matmul_kernel(a_ref, b_ref, bias_ref, o_ref, acc_ref, *, act):
    k = pl.program_id(2)

    @pl.when(k == 0)
    def _():
        acc_ref[...] = jnp.zeros_like(acc_ref)

    acc_ref[...] += jnp.dot(a_ref[...], b_ref[...],
                            preferred_element_type=jnp.float32)

    @pl.when(k == pl.num_programs(2) - 1)
    def _():
        y = acc_ref[...] + bias_ref[...]
        if act == "relu":
            y = jnp.maximum(y, 0.0)
        elif act == "sigmoid":
            y = jax.nn.sigmoid(y)
        o_ref[...] = y.astype(o_ref.dtype)


@functools.partial(jax.jit, static_argnames=("act", "out_dtype"))
def matmul_act(a, b, bias, *, act="none", out_dtype=jnp.float32):
    """(M,K)@(K,N)+bias with fused activation.  bf16 MXU feed, f32 acc.

    K and N are never zero-padded to 128: blocks use the full array extent,
    so low-channel convolutions do no wasted MXU / HBM work.
    """
    M, K = a.shape
    _, N = b.shape
    a = a.astype(jnp.bfloat16)
    b = b.astype(jnp.bfloat16)
    bias2 = bias.astype(jnp.float32).reshape(1, N)

    if K <= 2560:
        tk, Kp = K, K
    else:                                   # (not hit by this net)
        tk, Kp = _pick_tile(K, 1024, 128)
        a = jnp.pad(a, ((0, 0), (0, Kp - K)))
        b = jnp.pad(b, ((0, Kp - K), (0, 0)))
    tm = M if M <= 1024 else 512
    tn = N if (N % 128 != 0) else min(N, 256)
    grid = (_cdiv(M, tm), _cdiv(N, tn), Kp // tk)

    return pl.pallas_call(
        functools.partial(_matmul_kernel, act=act),
        out_shape=jax.ShapeDtypeStruct((M, N), out_dtype),
        grid=grid,
        in_specs=[pl.BlockSpec((tm, tk), lambda i, j, k: (i, k)),
                  pl.BlockSpec((tk, tn), lambda i, j, k: (k, j)),
                  pl.BlockSpec((1, tn), lambda i, j, k: (0, j))],
        out_specs=pl.BlockSpec((tm, tn), lambda i, j, k: (i, j)),
        scratch_shapes=[pltpu.VMEM((tm, tn), jnp.float32)],
        compiler_params=_cparams(("parallel", "parallel", "arbitrary")),
    )(a, b, bias2)


# ----------------------------------------------------------------------------
# Direct stride-1 conv: width-folded tap accumulation
# ----------------------------------------------------------------------------

def _conv_tap_kernel(x_hbm, w_ref, bias_ref, o_ref, band_ref, sem_ref, *,
                     nb, th, wa, cm, k, act):
    b = pl.program_id(0)      # row band (over N * nb)
    c = pl.program_id(1)      # row chunk within the band
    j = pl.program_id(2)      # cout tile

    # Fetch the band once per (b); it stays resident in VMEM scratch for all
    # chunk / cout-tile iterations of this band.
    # TODO(synk): double-buffer this DMA across bands to hide its latency.
    @pl.when(jnp.logical_and(c == 0, j == 0))
    def _():
        n = b // nb
        row0 = (b % nb) * (th * wa)
        cp = pltpu.make_async_copy(
            x_hbm.at[n, pl.ds(row0, band_ref.shape[0]), :],
            band_ref, sem_ref.at[0])
        cp.start()
        cp.wait()

    base = pl.multiple_of(c * cm, 16)
    acc = jnp.zeros((cm, o_ref.shape[-1]), jnp.float32)
    for dy in range(k):       # kh taps; kw*cin already folded into the lanes
        a = band_ref[pl.ds(base + dy * wa, cm), :]
        acc = acc + jnp.dot(a, w_ref[dy], preferred_element_type=jnp.float32)
    y = acc + bias_ref[...]
    if act == "relu":
        y = jnp.maximum(y, 0.0)
    elif act == "sigmoid":
        y = jax.nn.sigmoid(y)
    o_ref[0] = y.astype(o_ref.dtype)


@functools.partial(jax.jit,
                   static_argnames=("k", "act", "out_dtype", "band_bytes"))
def _conv_same_direct(x, wd, bias_p, *, k, act, out_dtype=jnp.bfloat16,
                      band_bytes=_BAND_BYTES):
    """stride-1 'same' conv without im2col and without cin zero padding."""
    N, H, W, C = x.shape
    _, lane, npad = wd.shape                  # lane == k * C
    pd = (k - 1) // 2
    wa = _round_up(max(W, 1), 16)             # aligned padded row width

    rows_budget = max(1, band_bytes // (wa * lane * 2) - 2 * pd)
    rc = max(1, min(H, max(1, 256 // wa), rows_budget))   # image rows / chunk
    n_chunks = max(1, min(_cdiv(H, rc), max(1, rows_budget // rc)))
    th = rc * n_chunks                        # image rows per band
    nb = _cdiv(H, th)                         # bands per image
    cm = rc * wa                              # flat rows per chunk (16-aligned)
    lp = (th + 2 * pd) * wa                   # flat rows per band (with halo)
    hp = nb * th + 2 * pd

    # width-fold: lane index dx*C + c holds xpad[row, col+dx, c]
    xpad = jnp.pad(x.astype(jnp.bfloat16),
                   ((0, 0), (pd, hp - pd - H),
                    (pd, wa + k - 1 - pd - W), (0, 0)))
    xw = jnp.concatenate([xpad[:, :, dx:dx + wa, :] for dx in range(k)],
                         axis=-1)
    xw = xw.reshape(N, hp * wa, lane)

    tn = npad if npad % 128 else min(npad, 256)
    grid = (N * nb, n_chunks, npad // tn)

    out = pl.pallas_call(
        functools.partial(_conv_tap_kernel, nb=nb, th=th, wa=wa, cm=cm, k=k,
                          act=act),
        out_shape=jax.ShapeDtypeStruct((N * nb, th * wa, npad), out_dtype),
        grid=grid,
        in_specs=[pl.BlockSpec(memory_space=pl.ANY),
                  pl.BlockSpec((k, lane, tn), lambda b, c, j: (0, 0, j)),
                  pl.BlockSpec((1, tn), lambda b, c, j: (0, j))],
        out_specs=pl.BlockSpec((1, cm, tn), lambda b, c, j: (b, c, j)),
        scratch_shapes=[pltpu.VMEM((lp, lane), jnp.bfloat16),
                        pltpu.SemaphoreType.DMA((1,))],
        compiler_params=_cparams(("parallel", "arbitrary", "arbitrary")),
    )(xw, wd, bias_p.reshape(1, npad))

    out = out.reshape(N, nb * th, wa, npad)
    return out[:, :H, :W, :]


@functools.partial(jax.jit,
                   static_argnames=("k", "stride", "pad", "act", "out_dtype"))
def _conv_im2col(x, w_mat, bias, *, k, stride, pad, act,
                 out_dtype=jnp.bfloat16):
    """Strided convs: raw-cin bf16 im2col + fused matmul (no channel pad)."""
    N, H, W, C = x.shape
    cout = w_mat.shape[1]
    xp = jnp.pad(x.astype(jnp.bfloat16),
                 ((0, 0), (pad, pad), (pad, pad), (0, 0)))
    Ho = (H + 2 * pad - k) // stride + 1
    Wo = (W + 2 * pad - k) // stride + 1
    cols = []
    for dy in range(k):
        for dx in range(k):
            cols.append(xp[:, dy:dy + (Ho - 1) * stride + 1:stride,
                           dx:dx + (Wo - 1) * stride + 1:stride, :])
    patches = jnp.concatenate(cols, axis=-1).reshape(N * Ho * Wo, k * k * C)
    out = matmul_act(patches, w_mat, bias, act=act, out_dtype=out_dtype)
    return out.reshape(N, Ho, Wo, cout)


# ----------------------------------------------------------------------------
# Elementwise kernels (BN affine + residual + ReLU, SK scale) -- no padding
# ----------------------------------------------------------------------------

def _bn_kernel(x_ref, s_ref, t_ref, o_ref):
    x = x_ref[...].astype(jnp.float32)
    o_ref[...] = jnp.maximum(x * s_ref[...] + t_ref[...],
                             0.0).astype(o_ref.dtype)


def _bn_add_kernel(x_ref, r_ref, s_ref, t_ref, o_ref):
    x = x_ref[...].astype(jnp.float32)
    r = r_ref[...].astype(jnp.float32)
    o_ref[...] = jnp.maximum(x * s_ref[...] + t_ref[...] + r,
                             0.0).astype(o_ref.dtype)


def _bn2_add_kernel(x_ref, r_ref, s_ref, t_ref, rs_ref, rt_ref, o_ref):
    x = x_ref[...].astype(jnp.float32)
    r = r_ref[...].astype(jnp.float32)
    o_ref[...] = jnp.maximum(x * s_ref[...] + t_ref[...]
                             + r * rs_ref[...] + rt_ref[...],
                             0.0).astype(o_ref.dtype)


def _fold_factor(M, C):
    """Fold f rows into the lane axis so f*C is a multiple of 128."""
    f = 128 // math.gcd(C, 128)
    if 1 < f <= 128 and M % f == 0:
        return f
    return 1


def _elementwise(kernel, rows, chans, out_dtype=jnp.bfloat16):
    M, C = rows[0].shape
    f = _fold_factor(M, C)
    Mf, Cf = M // f, C * f
    rowsf = [a.reshape(Mf, Cf) for a in rows]
    chansf = [jnp.tile(a.astype(jnp.float32).reshape(1, C), (1, f))
              for a in chans]
    tm = Mf if Mf <= 1024 else (256 if Cf > 512 else 1024)
    rspec = pl.BlockSpec((tm, Cf), lambda i: (i, 0))
    cspec = pl.BlockSpec((1, Cf), lambda i: (0, 0))
    out = pl.pallas_call(
        kernel,
        out_shape=jax.ShapeDtypeStruct((Mf, Cf), out_dtype),
        grid=(_cdiv(Mf, tm),),
        in_specs=[rspec] * len(rowsf) + [cspec] * len(chansf),
        out_specs=rspec,
        compiler_params=_cparams(("parallel",)),
    )(*rowsf, *chansf)
    return out.reshape(M, C)


def _sk_scale_kernel(x_ref, w_ref, o_ref):
    o_ref[...] = (x_ref[...].astype(jnp.float32)
                  * w_ref[...]).astype(o_ref.dtype)


def _sk_scale_add_kernel(x_ref, w_ref, e_ref, o_ref):
    o_ref[...] = (x_ref[...].astype(jnp.float32) * w_ref[...]
                  + e_ref[...].astype(jnp.float32)).astype(o_ref.dtype)


@functools.partial(jax.jit, static_argnames=("with_add",))
def sk_scale(sum_u, w, e=None, *, with_add=False):
    """out[n,m,c] = sum_u[n,m,c] * w[n,c] (+ e[n,m,c])."""
    N, M, C = sum_u.shape
    f = _fold_factor(M, C)
    Mf, Cf = M // f, C * f
    x_arr = sum_u.reshape(N, Mf, Cf)
    w_arr = jnp.tile(w.astype(jnp.float32).reshape(N, 1, C), (1, 1, f))
    tm = Mf if Mf <= 1024 else (256 if Cf > 512 else 1024)
    xs = pl.BlockSpec((1, tm, Cf), lambda b, i: (b, i, 0))
    ws = pl.BlockSpec((1, 1, Cf), lambda b, i: (b, 0, 0))
    grid = (N, _cdiv(Mf, tm))
    cp = _cparams(("parallel", "parallel"))
    if with_add:
        e_arr = e.reshape(N, Mf, Cf)
        out = pl.pallas_call(
            _sk_scale_add_kernel,
            out_shape=jax.ShapeDtypeStruct((N, Mf, Cf), jnp.bfloat16),
            grid=grid, in_specs=[xs, ws, xs], out_specs=xs,
            compiler_params=cp)(x_arr, w_arr, e_arr)
    else:
        out = pl.pallas_call(
            _sk_scale_kernel,
            out_shape=jax.ShapeDtypeStruct((N, Mf, Cf), jnp.bfloat16),
            grid=grid, in_specs=[xs, ws], out_specs=xs,
            compiler_params=cp)(x_arr, w_arr)
    return out.reshape(N, M, C)


# ----------------------------------------------------------------------------
# NN building blocks
# ----------------------------------------------------------------------------

_DIRECT = {"ok": None}


def _direct_conv_ok():
    """One-time lowering/numerics probe of the direct conv (both the single
    band and the multi-band paths); falls back to im2col if unusable."""
    if _DIRECT["ok"] is None:
        try:
            x = jax.random.normal(jax.random.PRNGKey(7), (1, 9, 5, 3),
                                  jnp.float32)
            w = 0.1 * jax.random.normal(jax.random.PRNGKey(8), (3, 3, 3, 4),
                                        jnp.float32)
            b = jnp.arange(4, dtype=jnp.float32) * 0.01
            p = _prep_conv(w, b)
            ref = _conv_im2col(x, p["w_mat"], p["b"], k=3, stride=1, pad=1,
                               act="none", out_dtype=jnp.float32)
            got = _conv_same_direct(x, p["wd"], p["b_pad"], k=3, act="none",
                                    out_dtype=jnp.float32)[..., :4]
            got_b = _conv_same_direct(x, p["wd"], p["b_pad"], k=3, act="none",
                                      out_dtype=jnp.float32,
                                      band_bytes=1024)[..., :4]
            err = max(float(jnp.max(jnp.abs(got - ref))),
                      float(jnp.max(jnp.abs(got_b - ref))))
            _DIRECT["ok"] = bool(err < 5e-2)
        except Exception:
            _DIRECT["ok"] = False
    return _DIRECT["ok"]


def conv2d(x, p, *, stride=1, act="none", out_dtype=jnp.bfloat16):
    """'same' conv dispatcher over the prepared weight dict."""
    k, cout = p["k"], p["cout"]
    pad = (k - 1) // 2
    if k == 1:
        if stride > 1:
            x = x[:, ::stride, ::stride, :]
        N, H, W, C = x.shape
        out = matmul_act(x.reshape(N * H * W, C), p["w_mat"], p["b"],
                         act=act, out_dtype=out_dtype)
        return out.reshape(N, H, W, cout)
    if stride == 1 and _direct_conv_ok():
        out = _conv_same_direct(x, p["wd"], p["b_pad"], k=k, act=act,
                                out_dtype=out_dtype)
        return out[..., :cout] if out.shape[-1] != cout else out
    return _conv_im2col(x, p["w_mat"], p["b"], k=k, stride=stride, pad=pad,
                        act=act, out_dtype=out_dtype)


def conv_transpose2x2(x, p):
    """nn.ConvTranspose2d(kernel=2, stride=2) as 1x1 matmul + depth-to-space."""
    N, H, W, Cin = x.shape
    cout = p["cout"]
    out = matmul_act(x.reshape(N * H * W, Cin), p["w"], p["b4"],
                     act="none", out_dtype=jnp.bfloat16)
    out = out.reshape(N, H, W, 2, 2, cout).transpose(0, 1, 3, 2, 4, 5)
    return out.reshape(N, 2 * H, 2 * W, cout)


def _bn_scale_shift(x2, g, beta, eps=1e-5):
    # single fused pass over the activations for both moments
    xf = x2.astype(jnp.float32)
    m = xf.shape[0]
    s1 = jnp.sum(xf, axis=0)
    s2 = jnp.sum(xf * xf, axis=0)
    mean = s1 / m
    var = jnp.maximum(s2 / m - mean * mean, 0.0)
    scale = g * lax.rsqrt(var + eps)
    return scale, beta - mean * scale


@jax.jit
def bn_relu(x, g, beta):
    N, H, W, C = x.shape
    x2 = x.reshape(-1, C)
    s, t = _bn_scale_shift(x2, g, beta)
    return _elementwise(_bn_kernel, [x2], [s, t]).reshape(N, H, W, C)


@jax.jit
def bn_add_relu(x, g, beta, res):
    N, H, W, C = x.shape
    x2 = x.reshape(-1, C)
    s, t = _bn_scale_shift(x2, g, beta)
    return _elementwise(_bn_add_kernel, [x2, res.reshape(-1, C)],
                        [s, t]).reshape(N, H, W, C)


@jax.jit
def bn2_add_relu(x, g, beta, res, rg, rbeta):
    N, H, W, C = x.shape
    x2 = x.reshape(-1, C)
    r2 = res.reshape(-1, C)
    s, t = _bn_scale_shift(x2, g, beta)
    rs, rt = _bn_scale_shift(r2, rg, rbeta)
    return _elementwise(_bn2_add_kernel, [x2, r2],
                        [s, t, rs, rt]).reshape(N, H, W, C)


def maxpool_3x3_s2(x):
    return lax.reduce_window(x, jnp.array(-jnp.inf, x.dtype), lax.max,
                             (1, 3, 3, 1), (1, 2, 2, 1),
                             ((0, 0), (1, 1), (1, 1), (0, 0)))


def avg_pool(x, k):
    if k == 1:
        return x
    N, H, W, C = x.shape
    return x.reshape(N, H // k, k, W // k, k, C).mean(axis=(2, 4))


def nearest_up(x, s):
    if s == 1:
        return x
    return jnp.repeat(jnp.repeat(x, s, axis=1), s, axis=2)


def bilinear_resize(x, out_h, out_w, align_corners):
    """PyTorch F.interpolate(mode='bilinear') semantics, no anti-aliasing."""
    N, H, W, C = x.shape
    if out_h == H and out_w == W and not align_corners:
        return x

    def src_idx(out_n, in_n):
        o = jnp.arange(out_n, dtype=jnp.float32)
        if align_corners:
            scale = (in_n - 1) / (out_n - 1) if out_n > 1 else 0.0
            s = o * scale
        else:
            scale = in_n / out_n
            s = jnp.maximum((o + 0.5) * scale - 0.5, 0.0)
        i0 = jnp.clip(jnp.floor(s).astype(jnp.int32), 0, in_n - 1)
        i1 = jnp.minimum(i0 + 1, in_n - 1)
        w = s - i0.astype(jnp.float32)
        return i0, i1, w

    y0, y1, wy = src_idx(out_h, H)
    x0, x1, wx = src_idx(out_w, W)
    wy = wy[None, :, None, None]
    wx = wx[None, None, :, None]
    rows0 = x[:, y0]                 # gather each source row set once
    rows1 = x[:, y1]
    top = rows0[:, :, x0] * (1 - wx) + rows0[:, :, x1] * wx
    bot = rows1[:, :, x0] * (1 - wx) + rows1[:, :, x1] * wx
    return top * (1 - wy) + bot * wy


# ----------------------------------------------------------------------------
# Model forward (mirrors the PyTorch module structure)
# ----------------------------------------------------------------------------

def sk_weights(ksm, sum_u):
    """a1 == a2 == a3 in the reference, so softmax over 3C logits collapses
    to softmax(a)/3 applied to (x1+x2+x3)."""
    squeeze = jnp.mean(sum_u, axis=1)
    z = jnp.maximum(squeeze @ ksm["w1"] + ksm["b1"], 0.0)
    a = z @ ksm["w2"] + ksm["b2"]
    return jax.nn.softmax(a, axis=-1) / 3.0


def nsaf_fwd(p, in1, in2, residual):
    """NSAF + the encoder residual add (e = e + nsaf(e, .)) fused at the end."""
    if in2.shape[1:3] != in1.shape[1:3]:
        in2 = bilinear_resize(in2, in1.shape[1], in1.shape[2],
                              align_corners=False)
    x = jnp.concatenate([in1, in2], axis=-1)
    N, H, W, _ = x.shape
    c = p["out_c"]
    y = conv2d(x, p["conv123"])                  # three 1x1 convs, one matmul
    y = bn_relu(y, p["bn123"]["g"], p["bn123"]["beta"])
    sum_u = jnp.sum(y.reshape(N, H * W, 3, c).astype(jnp.float32), axis=2)
    wsk = sk_weights(p["ksm"], sum_u)
    out = sk_scale(sum_u, wsk, residual.reshape(N, H * W, c), with_add=True)
    return out.reshape(N, H, W, c)


def basic_block_fwd(p, x):
    s = p["stride"]
    y = conv2d(x, p["conv1"], stride=s)
    y = bn_relu(y, p["bn1"]["g"], p["bn1"]["beta"])
    y = conv2d(y, p["conv2"])
    if "down_conv" in p:
        idn = conv2d(x, p["down_conv"], stride=s)
        return bn2_add_relu(y, p["bn2"]["g"], p["bn2"]["beta"],
                            idn, p["down_bn"]["g"], p["down_bn"]["beta"])
    return bn_add_relu(y, p["bn2"]["g"], p["bn2"]["beta"], x)


def decoder_fwd(p, x1, x2):
    x1 = conv_transpose2x2(x1, p)
    if x2.shape[1:3] != x1.shape[1:3]:
        x2 = bilinear_resize(x2, x1.shape[1], x1.shape[2], align_corners=False)
    x = jnp.concatenate([x1, x2.astype(x1.dtype)], axis=-1)
    return conv2d(x, p["conv"], act="relu")      # ReLU fused in conv epilogue


def psunet_fwd(p, x):
    Hin, Win = x.shape[1], x.shape[2]
    e1 = conv2d(x, p["l1_conv"], stride=2)
    e1 = bn_relu(e1, p["l1_bn"]["g"], p["l1_bn"]["beta"])
    t = maxpool_3x3_s2(e1)
    t = basic_block_fwd(p["layer2"]["b1"], t)
    e2 = basic_block_fwd(p["layer2"]["b2"], t)
    e3 = basic_block_fwd(p["layer3"]["b2"],
                         basic_block_fwd(p["layer3"]["b1"], e2))
    e4 = basic_block_fwd(p["layer4"]["b2"],
                         basic_block_fwd(p["layer4"]["b1"], e3))
    f = basic_block_fwd(p["layer5"]["b2"],
                        basic_block_fwd(p["layer5"]["b1"], e4))

    # NSAFs consume the ORIGINAL encoder maps; the adds are applied afterwards
    n1 = nsaf_fwd(p["nsaf1"], e1, e2, e1)
    n2 = nsaf_fwd(p["nsaf2"], e2, e3, e2)
    n3 = nsaf_fwd(p["nsaf3"], e3, e4, e3)
    e1, e2, e3 = n1, n2, n3

    d4 = decoder_fwd(p["dec4"], f, e4)
    d3 = decoder_fwd(p["dec3"], d4, e3)
    d2 = decoder_fwd(p["dec2"], d3, e2)
    d1 = decoder_fwd(p["dec1"], d2, e1)

    d0 = bilinear_resize(d1, 2 * d1.shape[1], 2 * d1.shape[2],
                         align_corners=True)
    d0 = conv2d(d0, p["dec0_c1"])
    d0 = conv2d(d0, p["dec0_c2"])
    out = conv2d(d0, p["conv_last"], out_dtype=jnp.float32)
    return bilinear_resize(out, Hin, Win, align_corners=False)


def attention_fwd(p, x):
    N, H, W, _ = x.shape
    c = 6
    y = conv2d(x, p["conv123"])          # 3x3/5x5/7x7 merged into one 7x7
    y = bn_relu(y, p["bn123"]["g"], p["bn123"]["beta"])
    sum_u = jnp.sum(y.reshape(N, H * W, 3, c).astype(jnp.float32), axis=2)
    wsk = sk_weights(p["ksm"], sum_u)
    u = sk_scale(sum_u, wsk).reshape(N, H, W, c)
    return conv2d(u, p["layer_out"], act="sigmoid", out_dtype=jnp.float32)


def psfunet_fwd(params, x_nchw):
    x = jnp.transpose(x_nchw, (0, 2, 3, 1)).astype(jnp.float32)  # NCHW->NHWC
    branches = []
    for name, k in (("unet1", 16), ("unet2", 8), ("unet3", 4),
                    ("unet4", 2), ("unet5", 1)):
        xi = avg_pool(x, k)
        xi = psunet_fwd(params[name], xi)
        branches.append(nearest_up(xi, k))
    y = jnp.concatenate([x] + branches, axis=-1)      # 3 + 5*3 = 18 channels
    y = jnp.maximum(y, 0.0)                           # final ReLU (input prep)
    y = attention_fwd(params["att"], y)               # (N, H, W, 1)
    return jnp.transpose(y, (0, 3, 1, 2))             # NHWC -> NCHW


# ----------------------------------------------------------------------------
# Deterministic parameter construction (synthetic, shapes from PyTorch init)
# ----------------------------------------------------------------------------

class _Init:
    def __init__(self, key):
        self._key = key

    def _next(self):
        self._key, k = jax.random.split(self._key)
        return k

    def normal(self, shape, scale):
        return scale * jax.random.normal(self._next(), shape, jnp.float32)

    def conv_w(self, k, cin, cout):
        fan_in = k * k * cin
        return self.normal((k, k, cin, cout), (2.0 / fan_in) ** 0.5)

    def bn(self, c):
        return {"g": 1.0 + self.normal((c,), 0.1),
                "beta": self.normal((c,), 0.1)}

    def linear(self, cin, cout):
        return {"w": self.normal((cin, cout), (1.0 / cin) ** 0.5),
                "b": self.normal((cout,), 0.02)}


def _prep_conv(w, b):
    """(k,k,cin,cout) raw weight -> bf16 layouts for both conv paths.

    wd    : (k, k*cin, npad)   width-folded tap layout (direct kernel)
    w_mat : (k*k*cin, cout)    raw-cin matmul layout (im2col / 1x1 path)
    """
    k, _, cin, cout = w.shape
    npad = cout if cout >= 8 else 8
    wd = w.reshape(k, k * cin, cout)
    if npad != cout:
        wd = jnp.pad(wd, ((0, 0), (0, 0), (0, npad - cout)))
    wd = wd.astype(jnp.bfloat16)
    w_mat = w.reshape(k * k * cin, cout).astype(jnp.bfloat16)
    bias = (jnp.zeros((cout,), jnp.float32) if b is None
            else b.astype(jnp.float32))
    b_pad = jnp.pad(bias, (0, npad - cout)) if npad != cout else bias
    return {"wd": wd, "w_mat": w_mat, "b": bias, "b_pad": b_pad,
            "k": k, "cin": cin, "cout": cout}


def _conv_param(init, k, cin, cout, bias=True):
    b = init.normal((cout,), 0.02) if bias else None
    return _prep_conv(init.conv_w(k, cin, cout), b)


def _make_block(init, cin, cout, stride):
    p = {"conv1": _conv_param(init, 3, cin, cout, bias=False),
         "bn1": init.bn(cout),
         "conv2": _conv_param(init, 3, cout, cout, bias=False),
         "bn2": init.bn(cout),
         "stride": stride}
    if stride != 1 or cin != cout:
        p["down_conv"] = _conv_param(init, 1, cin, cout, bias=False)
        p["down_bn"] = init.bn(cout)
    return p


def _make_layer(init, cin, cout, stride):
    return {"b1": _make_block(init, cin, cout, stride),
            "b2": _make_block(init, cout, cout, 1)}


def _make_sk(init, middle, out_c):
    a1 = init.linear(out_c, middle)
    a2 = init.linear(middle, out_c)
    return {"w1": a1["w"], "b1": a1["b"], "w2": a2["w"], "b2": a2["b"]}


def _make_nsaf(init, cin, cout):
    # three 1x1 convs (dilation irrelevant for 1x1), merged along cout
    ws = [init.conv_w(1, cin, cout) for _ in range(3)]
    bns = [init.bn(cout) for _ in range(3)]
    return {"conv123": _prep_conv(jnp.concatenate(ws, axis=-1), None),
            "bn123": {"g": jnp.concatenate([b["g"] for b in bns]),
                      "beta": jnp.concatenate([b["beta"] for b in bns])},
            "ksm": _make_sk(init, 2, cout),
            "out_c": cout}


def _make_decoder(init, cin, mid, cout):
    up_w = init.normal((cin, 2, 2, cout), (1.0 / cin) ** 0.5)
    up_b = init.normal((cout,), 0.02)
    return {"w": up_w.reshape(cin, 4 * cout).astype(jnp.bfloat16),
            "b4": jnp.tile(up_b, 4),
            "cout": cout,
            "conv": _conv_param(init, 3, mid, cout, bias=True)}


def _make_psunet(init, in_channels=3, out_channels=3):
    return {
        "l1_conv": _conv_param(init, 7, in_channels, 64, bias=False),
        "l1_bn": init.bn(64),
        "layer2": _make_layer(init, 64, 64, 1),
        "layer3": _make_layer(init, 64, 128, 2),
        "layer4": _make_layer(init, 128, 256, 2),
        "layer5": _make_layer(init, 256, 512, 2),
        "dec4": _make_decoder(init, 512, 256 + 256, 256),
        "dec3": _make_decoder(init, 256, 256 + 128, 256),
        "dec2": _make_decoder(init, 256, 128 + 64, 128),
        "dec1": _make_decoder(init, 128, 64 + 64, 64),
        "dec0_c1": _conv_param(init, 3, 64, 32, bias=False),
        "dec0_c2": _conv_param(init, 3, 32, 64, bias=False),
        "conv_last": _conv_param(init, 1, 64, out_channels, bias=True),
        "nsaf1": _make_nsaf(init, 64 + 64, 64),
        "nsaf2": _make_nsaf(init, 64 + 128, 64),
        "nsaf3": _make_nsaf(init, 128 + 256, 128),
    }


def _make_attention(init, channel_for_input=18, out_c=6):
    # three stride-1 'same' convs (3x3/5x5/7x7) zero-embedded into one 7x7;
    # with the width-folded direct conv the MXU contraction holds the 7*18=126
    # real input values (no channel zero padding), so the merge stays cheap.
    w3 = init.conv_w(3, channel_for_input, out_c)
    b3 = init.normal((out_c,), 0.02)
    w5 = init.conv_w(5, channel_for_input, out_c)
    b5 = init.normal((out_c,), 0.02)
    w7 = init.conv_w(7, channel_for_input, out_c)
    b7 = init.normal((out_c,), 0.02)
    bns = [init.bn(out_c) for _ in range(3)]
    wm = jnp.zeros((7, 7, channel_for_input, 3 * out_c), jnp.float32)
    wm = wm.at[2:5, 2:5, :, 0:out_c].set(w3)
    wm = wm.at[1:6, 1:6, :, out_c:2 * out_c].set(w5)
    wm = wm.at[:, :, :, 2 * out_c:].set(w7)
    bm = jnp.concatenate([b3, b5, b7])
    return {"conv123": _prep_conv(wm, bm),
            "bn123": {"g": jnp.concatenate([b["g"] for b in bns]),
                      "beta": jnp.concatenate([b["beta"] for b in bns])},
            "ksm": _make_sk(init, 4, out_c),
            "layer_out": _conv_param(init, 3, out_c, 1, bias=True)}


def make_psfunet_params(key, in_channels=3):
    init = _Init(key)
    return {
        "unet1": _make_psunet(init, in_channels, 3),
        "unet2": _make_psunet(init, in_channels, 3),
        "unet3": _make_psunet(init, in_channels, 3),
        "unet4": _make_psunet(init, in_channels, 3),
        "unet5": _make_psunet(init, in_channels, 3),
        "att": _make_attention(init, 18, 6),
    }


# ----------------------------------------------------------------------------

if __name__ == "__main__":
    key = jax.random.PRNGKey(0)
    kx, kp = jax.random.split(key)
    # Smallest legal input: H, W must be >= 16 (AvgPool2d(kernel_size=16)).
    x = jax.random.normal(kx, (2, 3, 16, 16), jnp.float32)      # NCHW (PyTorch)
    params = make_psfunet_params(kp)

    out = psfunet_fwd(params, x)
    out = jax.block_until_ready(out)

    assert out.shape == (2, 1, 16, 16), out.shape
    assert bool(jnp.all(jnp.isfinite(out)))
    assert bool(jnp.all((out >= 0.0) & (out <= 1.0)))           # sigmoid output
    print("KERNEL_OK")
</pallas_src>

<mosaic_0001>
module attributes {stable_mosaic.version = 11 : i64} {
  func.func @_matmul_kernel(%arg0: i32, %arg1: i32, %arg2: i32, %arg3: memref<2x147xbf16, #tpu.memory_space<vmem>>, %arg4: memref<147x64xbf16, #tpu.memory_space<vmem>>, %arg5: memref<1x64xf32, #tpu.memory_space<vmem>>, %arg6: memref<2x64xbf16, #tpu.memory_space<vmem>>, %arg7: memref<2x64xf32, #tpu.memory_space<vmem>>) attributes {dimension_semantics = [#tpu.dimension_semantics<parallel>, #tpu.dimension_semantics<parallel>, #tpu.dimension_semantics<arbitrary>], iteration_bounds = array<i64: 1, 1, 1>, scalar_prefetch = 0 : i64, scratch_operands = 1 : i64, tpu.core_type = #tpu.core_type<tc>, window_params = [{transform_indices = @transform_0, window_bounds = array<i64: 2, 147>}, {transform_indices = @transform_1, window_bounds = array<i64: 147, 64>}, {transform_indices = @transform_2, window_bounds = array<i64: 1, 64>}, {transform_indices = @transform_3, window_bounds = array<i64: 2, 64>}]} {
    %c0_i32 = arith.constant 0 : i32
    %0 = arith.cmpi eq, %arg2, %c0_i32 : i32
    %1 = arith.extui %0 : i1 to i32
    %c0_i32_0 = arith.constant 0 : i32
    %2 = arith.cmpi ne, %1, %c0_i32_0 : i32
    scf.if %2 {
      %cst_10 = arith.constant 0.000000e+00 : f32
      %12 = vector.broadcast %cst_10 : f32 to vector<2x64xf32>
      %c0_11 = arith.constant 0 : index
      %c0_12 = arith.constant 0 : index
      %13 = vector.load %arg7[%c0_11, %c0_12] : memref<2x64xf32, #tpu.memory_space<vmem>>, vector<2x64xf32>
      tpu.vector_store %arg7[%c0_11, %c0_12], %12 {strides = array<i32>} : memref<2x64xf32, #tpu.memory_space<vmem>>, vector<2x64xf32>,
    } else {
    }
    %c0 = arith.constant 0 : index
    %c0_1 = arith.constant 0 : index
    %3 = vector.load %arg7[%c0, %c0_1] : memref<2x64xf32, #tpu.memory_space<vmem>>, vector<2x64xf32>
    %c0_2 = arith.constant 0 : index
    %c0_3 = arith.constant 0 : index
    %4 = vector.load %arg3[%c0_2, %c0_3] : memref<2x147xbf16, #tpu.memory_space<vmem>>, vector<2x147xbf16>
    %c0_4 = arith.constant 0 : index
    %c0_5 = arith.constant 0 : index
    %5 = vector.load %arg4[%c0_4, %c0_5] : memref<147x64xbf16, #tpu.memory_space<vmem>>, vector<147x64xbf16>
    %cst = arith.constant dense<0.000000e+00> : vector<2x64xf32>
    %6 = tpu.matmul %4, %5, %cst {dimension_numbers = #tpu.dot_dimension_numbers<[1], [0], [0], [1], [0, 0, 1, 1], [], []>} : vector<2x147xbf16>, vector<147x64xbf16>, vector<2x64xf32> -> vector<2x64xf32>
    %7 = arith.addf %3, %6 : vector<2x64xf32>
    %c0_6 = arith.constant 0 : index
    %c0_7 = arith.constant 0 : index
    %8 = vector.load %arg7[%c0_6, %c0_7] : memref<2x64xf32, #tpu.memory_space<vmem>>, vector<2x64xf32>
    tpu.vector_store %arg7[%c0_6, %c0_7], %7 {strides = array<i32>} : memref<2x64xf32, #tpu.memory_space<vmem>>, vector<2x64xf32>,
    %c0_i32_8 = arith.constant 0 : i32
    %9 = arith.cmpi eq, %arg2, %c0_i32_8 : i32
    %10 = arith.extui %9 : i1 to i32
    %c0_i32_9 = arith.constant 0 : i32
    %11 = arith.cmpi ne, %10, %c0_i32_9 : i32
    scf.if %11 {
      %c0_10 = arith.constant 0 : index
      %c0_11 = arith.constant 0 : index
      %12 = vector.load %arg7[%c0_10, %c0_11] : memref<2x64xf32, #tpu.memory_space<vmem>>, vector<2x64xf32>
      %c0_12 = arith.constant 0 : index
      %c0_13 = arith.constant 0 : index
      %13 = vector.load %arg5[%c0_12, %c0_13] : memref<1x64xf32, #tpu.memory_space<vmem>>, vector<1x64xf32>
      %14 = vector.broadcast %13 : vector<1x64xf32> to vector<2x64xf32>
      %15 = arith.addf %12, %14 : vector<2x64xf32>
      %16 = arith.truncf %15 : vector<2x64xf32> to vector<2x64xbf16>
      %c0_14 = arith.constant 0 : index
      %c0_15 = arith.constant 0 : index
      %17 = vector.load %arg6[%c0_14, %c0_15] : memref<2x64xbf16, #tpu.memory_space<vmem>>, vector<2x64xbf16>
      tpu.vector_store %arg6[%c0_14, %c0_15], %16 {strides = array<i32>} : memref<2x64xbf16, #tpu.memory_space<vmem>>, vector<2x64xbf16>,
    } else {
    }
    return
  }
  func.func @transform_0(%arg0: i32, %arg1: i32, %arg2: i32) -> (i32, i32) {
    %c0_i32 = arith.constant 0 : i32
    return %arg0, %arg2 : i32, i32
  }
  func.func @transform_1(%arg0: i32, %arg1: i32, %arg2: i32) -> (i32, i32) {
    %c0_i32 = arith.constant 0 : i32
    return %arg2, %arg1 : i32, i32
  }
  func.func @transform_2(%arg0: i32, %arg1: i32, %arg2: i32) -> (i32, i32) {
    %c0_i32 = arith.constant 0 : i32
    %c0_i32_0 = arith.constant 0 : i32
    return %c0_i32, %arg1 : i32, i32
  }
  func.func @transform_3(%arg0: i32, %arg1: i32, %arg2: i32) -> (i32, i32) {
    %c0_i32 = arith.constant 0 : i32
    return %arg0, %arg1 : i32, i32
  }
}

</mosaic_0001>

<llo_original>
// kernel: matmul_act.1
$region0: #{matmul_act.1}
  #allocation0 [shape = 'u32[]', space=smem, size = 0x4, offset = 0x4, fixed_abs, tag = 'smem constant byte address 0x4 - core index']
  #allocation1 [shape = 'u32[144,128]{1,0:T(1,128)}', space=vmem, size = 0x12000, scoped, tag = 'internal scratch']
  #allocation2 [shape = 'f32[2,64]{1,0:T(2,128)}', space=vmem, size = 0x400, scoped, tag = 'scratch operand']
  %s0 = inlined_call_operand.vmem [shape: bf16[2,147], index: 0, kind: input, shape index: {}]
  %s1 = inlined_call_operand.vmem [shape: bf16[147,64], index: 1, kind: input, shape index: {}]
  %s2 = inlined_call_operand.vmem [shape: f32[1,64], index: 2, kind: input, shape index: {}]
  %s3 = inlined_call_operand.hbm [shape: bf16[2,64], index: 3, kind: output, shape index: {}]
  %s4 = sld [smem:[#allocation0]]
  $region30: #{matmul_act.1} parent=0
    _
  %s6 = ssub.s32 1, %s4
  %s7 = scalar_select 0, %s6, %s4
  $region1: #{matmul_act.1} parent=0
    #allocation3 [shape = 'u8[512]{0}', space=vmem, size = 0x400, scoped, tag = 'output window, operand 0, single buffered']
    #allocation4 [shape = 's32[1]{0}', space=sflag, size = 0x4, scoped, tag = 'scoped memory for matmul_act.1']
    %8 = vsyncpa [#allocation4], 0
    // Predicated region
    $region2: #{matmul_act.1} parent=1 // pred_check
      _
    $region3: #{matmul_act.1} parent=1 // pred_check_branch
      %10 = sbr.rel (0) target = $region5
    $region4: #{matmul_act.1} parent=1 // pred_region
      _
    $region5: #{matmul_act.1} parent=1 // pred_fallthru
      _
    // Predicated region
    $region6: #{matmul_act.1} parent=1 // pred_check
      _
    $region7: #{matmul_act.1} parent=1 // pred_check_branch
      %12 = sbr.rel (0) target = $region9
    $region8: #{matmul_act.1} parent=1 // pred_region
      _
    $region9: #{matmul_act.1} parent=1 // pred_fallthru
      _
    // Predicated region
    $region10: #{matmul_act.1} parent=1 // pred_check
      _
    $region11: #{matmul_act.1} parent=1 // pred_check_branch
      %14 = sbr.rel (0) target = $region13
    $region12: #{matmul_act.1} parent=1 // pred_region
      _
    $region13: #{matmul_act.1} parent=1 // pred_fallthru
      _
    %p16 = scmp.eq.s32.totalorder 0, 0
    // Predicated region
    $region14: #{matmul_act.1} parent=1 // pred_check
      %p17 = pneg %p16
    $region15: #{matmul_act.1} parent=1 // pred_check_branch
      %19 = sbr.rel (%p17) target = $region17
    $region16: #{matmul_act.1} parent=1 // pred_region
      %vm20 = vcmask 517120
      %21 = vst.msk [vmem:[#allocation2] sm:$0x3] %vm20, 0.0
    $region17: #{matmul_act.1} parent=1 // pred_fallthru
      _
    %v22 = vld [vmem:[#allocation2] sm:$0x3]
    %v23 = vld [vmem:[%s0] sm:$0x3]
    %v24 = vld [vmem:[%s1] sm:$0xf]
    %v25 = vld [vmem:[%s1 + $0x4] sm:$0xf]
    %v26 = vld [vmem:[%s1 + $0x8] sm:$0xf]
    %v27 = vld [vmem:[%s1 + $0xc] sm:$0xf]
    %v28 = vld [vmem:[%s1 + $0x10] sm:$0xf]
    %v29 = vld [vmem:[%s1 + $0x14] sm:$0xf]
    %v30 = vld [vmem:[%s1 + $0x18] sm:$0xf]
    %v31 = vld [vmem:[%s1 + $0x1c] sm:$0xf]
    %v32 = vld [vmem:[%s1 + $0x20] sm:$0xf]
    %v33 = vld [vmem:[%s1 + $0x24] sm:$0xf]
    %v34 = vld [vmem:[%s1 + $0x28] sm:$0xf]
    %v35 = vld [vmem:[%s1 + $0x2c] sm:$0xf]
    %v36 = vld [vmem:[%s1 + $0x30] sm:$0xf]
    %v37 = vld [vmem:[%s1 + $0x34] sm:$0xf]
    %v38 = vld [vmem:[%s1 + $0x38] sm:$0xf]
    %v39 = vld [vmem:[%s1 + $0x3c] sm:$0xf]
    %v40 = vld [vmem:[%s1 + $0x40] sm:$0xf]
    %v41 = vld [vmem:[%s1 + $0x44] sm:$0xf]
    %v42 = vld [vmem:[%s1 + $0x48] sm:$0x3]
    %v45 = vunpack.c.l.s4 1966171168
    %v46 = vunpack.c.0.s8 %v45
    %v47 = vlaneseq
    %v48 = vshrl.u32 %v47, 7
    %v49 = vsub.s32 %v46, %v48
    %v50 = vrot.slane %v23, %v49
    %v51 = vcombine.high %v50, %v50
    %v53 = vunpack.c.l.s4 1966171168
    %v54 = vunpack.c.0.s8 %v53
    %v55 = vlaneseq
    %v56 = vshrl.u32 %v55, 7
    %v57 = vsub.s32 %v54, %v56
    %v58 = vrot.slane %v50, %v57
    %v60 = vunpack.c.l.s4 1966171168
    %v61 = vunpack.c.0.s8 %v60
    %v62 = vlaneseq
    %v63 = vshrl.u32 %v62, 7
    %v64 = vsub.s32 %v61, %v63
    %v65 = vrot.slane %v51, %v64
    %v86 = vunpack.c.l.b16 %v24
    %v87 = vunpack.c.l.b16 %v25
    %v88 = vunpack.c.l.b16 %v26
    %v89 = vunpack.c.l.b16 %v27
    %v90 = vunpack.c.l.b16 %v28
    %v91 = vunpack.c.l.b16 %v29
    %v92 = vunpack.c.l.b16 %v30
    %v93 = vunpack.c.l.b16 %v31
    %v94 = vunpack.c.l.b16 %v32
    %v95 = vunpack.c.l.b16 %v33
    %v96 = vunpack.c.l.b16 %v34
    %v97 = vunpack.c.l.b16 %v35
    %v98 = vunpack.c.l.b16 %v36
    %v99 = vunpack.c.l.b16 %v37
    %v100 = vunpack.c.l.b16 %v38
    %v101 = vunpack.c.l.b16 %v39
    %v102 = vunpack.c.l.b16 %v40
    %v103 = vunpack.c.l.b16 %v41
    %v104 = vunpack.c.l.b16 %v42
    %v105 = vpack.c.b16 %v87, %v86
    %v106 = vpack.c.b16 %v89, %v88
    %v107 = vpack.c.b16 %v91, %v90
    %v108 = vpack.c.b16 %v93, %v92
    %v109 = vpack.c.b16 %v95, %v94
    %v110 = vpack.c.b16 %v97, %v96
    %v111 = vpack.c.b16 %v99, %v98
    %v112 = vpack.c.b16 %v101, %v100
    %v113 = vpack.c.b16 %v103, %v102
    %v114 = vpack.c.b16 %v104, %v104
    %vm124 = vcmask 154624
    %v126 = vsel %vm124, %v65, 0
    %vm128 = vcmask 1040384
    %vm129 = vcmask 1041408
    %v130 = vsel %vm128, 4294967295, 65535
    %v131 = vsel %vm129, %v130, 0
    %v133 = vand.u32 %v114, %v131
    %135 = vmatprep.subr.bf16.mxu0 0
    %136 = vmatpush1.bf16.msra.mxu0 %v105
    %137 = vmatprep.subr.bf16.mxu0 0
    %138 = vmatpush1.bf16.msra.mxu0 %v106
    %139 = vmatprep.subr.bf16.mxu0 0
    %140 = vmatpush1.bf16.msra.mxu0 %v107
    %141 = vmatprep.subr.bf16.mxu0 0
    %142 = vmatpush1.bf16.msra.mxu0 %v108
    %143 = vmatprep.subr.bf16.mxu0 0
    %144 = vmatpush1.bf16.msra.mxu0 %v109
    %145 = vmatprep.subr.bf16.mxu0 0
    %146 = vmatpush1.bf16.msra.mxu0 %v110
    %147 = vmatprep.subr.bf16.mxu0 0
    %148 = vmatpush1.bf16.msra.mxu0 %v111
    %149 = vmatprep.subr.bf16.mxu0 0
    %150 = vmatpush1.bf16.msra.mxu0 %v112
    %151 = vmatprep.subr.bf16.mxu0 0
    %152 = vmatpush1.bf16.msra.mxu0 %v113
    %153 = vmatprep.subr.bf16.mxu0 0
    %154 = vmatpush1.bf16.msra.mxu0 %v133
    %155 = vmatprep.subr.bf16.mxu0 0
    %156 = vmatpush1.bf16.msra.mxu0 0
    %157 = vmatprep.subr.bf16.mxu0 0
    %158 = vmatpush1.bf16.msra.mxu0 0
    %159 = vmatprep.subr.bf16.mxu0 0
    %160 = vmatpush1.bf16.msra.mxu0 0
    %161 = vmatprep.subr.bf16.mxu0 0
    %162 = vmatpush1.bf16.msra.mxu0 0
    %163 = vmatprep.subr.bf16.mxu0 0
    %164 = vmatpush1.bf16.msra.mxu0 0
    %165 = vmatprep.subr.bf16.mxu0 0
    %166 = vmatpush1.bf16.msra.mxu0 0
    %167 = vmatprep.mubr.bf16.mxu0 %v126
    %168 = vmatmul.mubr.bf16.gmra.mrb[0].mxu0 %v58
    %v169 = vpop.f32.mrb[0].mxu0
    %v170 = vadd.f32 0.0, %v169
    %v171 = vpop.f32.mrb[0].mxu0
    %v172 = vpop.f32.mrb[0].mxu0
    %v173 = vpop.f32.mrb[0].mxu0
    %174 = vdwg.mxu0
    %v175 = vadd.f32 %v22, %v170
    %vm176 = vcmask 517120
    %177 = vst.msk [vmem:[#allocation2] sm:$0x3] %vm176, %v175
    // Predicated region
    $region18: #{matmul_act.1} parent=1 // pred_check
      %p178 = pneg %p16
    $region19: #{matmul_act.1} parent=1 // pred_check_branch
      %180 = sbr.rel (%p178) target = $region21
    $region20: #{matmul_act.1} parent=1 // pred_region
      %v181 = vld [vmem:[#allocation2] sm:$0x3]
      %v182 = vld [vmem:[%s2] sm:$0x1]
      %v184 = vlaneseq
      %v185 = vshrl.u32 %v184, 7
      %v186 = vsub.s32 0, %v185
      %v187 = vrot.slane %v182, %v186
      %v189 = vadd.f32 %v181, %v187
      %v190 = vpack.c.bf16 %v189, %v189
      %vm191 = vcmask 516096
      %192 = vst.msk [vmem:[#allocation3] sm:$0x1] %vm191, %v190
    $region21: #{matmul_act.1} parent=1 // pred_fallthru
      _
    // Predicated region
    $region22: #{matmul_act.1} parent=1 // pred_check
      _
    $region23: #{matmul_act.1} parent=1 // pred_check_branch
      %194 = sbr.rel (0) target = $region25
    $region24: #{matmul_act.1} parent=1 // pred_region
      %s196 = ssub.s32 16, 16
      %197 = vsyncadd [#allocation4], %s196
      %s199 = sshll.u32 [#allocation3], 4
      %s200 = int_to_ptr.vmem [resolvable:$true] %s199
      %202 = dma.vmem_to_hbm [thread:$0]  %s200, 16, %s3, [#allocation4]
    $region25: #{matmul_act.1} parent=1 // pred_fallthru
      _
    // Predicated region
    $region26: #{matmul_act.1} parent=1 // pred_check
      _
    $region27: #{matmul_act.1} parent=1 // pred_check_branch
      %204 = sbr.rel (0) target = $region29
    $region28: #{matmul_act.1} parent=1 // pred_region
      %205 = dma.done [#allocation4], 16
    $region29: #{matmul_act.1} parent=1 // pred_fallthru
      _
    %206 = vsyncpa [#allocation4], 1

</llo_original>
